<compile_context>
chip_gen: v7x
topology: tpu7x:2x2x1
jax: 0.10.0
libtpu: 0.0.40
codegen_flags: <defaults>
</compile_context>

<pallas_src>
import functools

import jax
import jax.numpy as jnp
from jax.experimental import pallas as pl
from jax.experimental.pallas import tpu as pltpu

EPS = 1e-5


# ---------------------------------------------------------------------------
# Row tiling helpers (cdiv grid + padding, no divisor search)
# ---------------------------------------------------------------------------
def _round_up(x, m):
    return ((x + m - 1) // m) * m


def _row_tiling(rows, max_tile=512):
    half = _round_up(pl.cdiv(rows, 2), 8)     # >= 2 grid steps when possible
    tile = max(8, min(max_tile, half))
    padded = _round_up(rows, tile)
    return tile, padded


def _pad_rows(a, padded):
    rows = a.shape[0]
    if padded == rows:
        return a
    return jnp.pad(a, ((0, padded - rows),) + ((0, 0),) * (a.ndim - 1))


# ---------------------------------------------------------------------------
# Kernel 1: fused linear  y = relu?(x @ W + b [+ residual])
# (BatchNorm scale/shift are pre-folded into W / b by the caller.)
# ---------------------------------------------------------------------------
def _linear_kernel(x_ref, w_ref, b_ref, o_ref, *, relu):
    y = jnp.dot(x_ref[...], w_ref[...],
                preferred_element_type=jnp.float32) + b_ref[...]
    if relu:
        y = jnp.maximum(y, 0.0)
    o_ref[...] = y


def _linear_res_kernel(x_ref, w_ref, b_ref, r_ref, o_ref, *, relu):
    y = (jnp.dot(x_ref[...], w_ref[...],
                 preferred_element_type=jnp.float32)
         + b_ref[...] + r_ref[...])
    if relu:
        y = jnp.maximum(y, 0.0)
    o_ref[...] = y


def fused_linear(x, w, b, residual=None, relu=False):
    rows, cin = x.shape
    cout = w.shape[1]
    tile, padded = _row_tiling(rows, max_tile=512)
    x_p = _pad_rows(x, padded)
    b2 = b.reshape(1, cout)

    row_in = pl.BlockSpec((tile, cin), lambda i: (i, 0))
    row_out = pl.BlockSpec((tile, cout), lambda i: (i, 0))
    w_spec = pl.BlockSpec((cin, cout), lambda i: (0, 0))
    b_spec = pl.BlockSpec((1, cout), lambda i: (0, 0))

    if residual is None:
        kern = functools.partial(_linear_kernel, relu=relu)
        in_specs = [row_in, w_spec, b_spec]
        args = (x_p, w, b2)
    else:
        kern = functools.partial(_linear_res_kernel, relu=relu)
        in_specs = [row_in, w_spec, b_spec, row_out]
        args = (x_p, w, b2, _pad_rows(residual, padded))

    out = pl.pallas_call(
        kern,
        out_shape=jax.ShapeDtypeStruct((padded, cout), jnp.float32),
        grid=(padded // tile,),
        in_specs=in_specs,
        out_specs=row_out,
        compiler_params=pltpu.CompilerParams(
            dimension_semantics=("parallel",)),
    )(*args)
    return out if padded == rows else out[:rows]


# ---------------------------------------------------------------------------
# Kernel 2: PointTransformerLayer core (+ linear_p MLP + bn2 + ReLU epilogue)
#   p_r  = linear_p(p_rel)                     (3->3, LN, ReLU, 3->C)
#   r_qk = x_k - x_q + p_r                     (mid_planes == out_planes)
#   w    = softmax_ns(linear_w(r_qk))          (LN,ReLU,C->Cs,LN,ReLU,Cs->Cs)
#   out  = sum_ns (x_v + p_r)[n,t,s,i] * w[n,t,i]   -> relu(bn2(out))
# ---------------------------------------------------------------------------
def _pt_attn_kernel(
    xq_ref, xk_ref, xv_ref, prel_ref,
    p1w_ref, p1b_ref, plns_ref, plnt_ref, p2w_ref, p2b_ref,
    wln1s_ref, wln1t_ref, w1w_ref, w1b_ref,
    wln2s_ref, wln2t_ref, w2w_ref, w2b_ref,
    bn2s_ref, bn2t_ref,
    o_ref, *, share_planes,
):
    tn, ns, C = xk_ref.shape
    Cs = C // share_planes

    xq = xq_ref[...]                              # (tn, C)
    xk = xk_ref[...]                              # (tn, ns, C)
    xv = xv_ref[...]                              # (tn, ns, C)
    prel = prel_ref[...].reshape(tn * ns, 3)      # (tn*ns, 3)

    # linear_p: Linear(3,3) -> LN -> ReLU -> Linear(3,C) as VPU broadcast-MACs
    # (3-wide contractions never belong on the MXU).
    h = p1b_ref[...]
    for k in range(3):
        h = h + prel[:, k:k + 1] * p1w_ref[k:k + 1, :]
    h = jnp.maximum(h * plns_ref[...] + plnt_ref[...], 0.0)
    p_r = p2b_ref[...]
    for k in range(3):
        p_r = p_r + h[:, k:k + 1] * p2w_ref[k:k + 1, :]
    p_r = p_r.reshape(tn, ns, C)

    # mid_planes == out_planes -> einops.reduce over p_r is the identity
    r = xk - xq[:, None, :] + p_r                 # (tn, ns, C)

    # linear_w: LN -> ReLU -> Linear(C, Cs) -> LN -> ReLU -> Linear(Cs, Cs)
    h1 = jnp.maximum(r * wln1s_ref[...] + wln1t_ref[...], 0.0)
    h2 = jnp.dot(h1.reshape(tn * ns, C), w1w_ref[...],
                 preferred_element_type=jnp.float32) + w1b_ref[...]
    h2 = jnp.maximum(h2 * wln2s_ref[...] + wln2t_ref[...], 0.0)
    # 4x4 final linear as VPU MACs (keeps the 4-lane result off the MXU FIFO)
    w = w2b_ref[...] + h2[:, 0:1] * w2w_ref[0:1, :]
    for k in range(1, Cs):
        w = w + h2[:, k:k + 1] * w2w_ref[k:k + 1, :]
    w = w.reshape(tn, ns, Cs)

    # softmax over the neighbor axis (torch dim=1); divide on the EUP slot
    m = jnp.max(w, axis=1, keepdims=True)
    e = jnp.exp(w - m)
    w = e * pl.reciprocal(jnp.sum(e, axis=1, keepdims=True), approx=True)

    val = (xv + p_r).reshape(tn, ns, share_planes, Cs)
    out = jnp.sum(val * w[:, :, None, :], axis=1).reshape(tn, C)

    # fused bn2 + ReLU epilogue
    o_ref[...] = jnp.maximum(out * bn2s_ref[...] + bn2t_ref[...], 0.0)


def pt_attention(xq, xk_g, xv_g, p_rel, P, share_planes):
    N, ns, C = xk_g.shape
    Cs = C // share_planes
    # Cap attention tile at 128 rows: lane-padded (tile, ns, 128) f32 blocks
    # double-buffered stay well within v7x's 64 MiB VMEM.
    tile, padded = _row_tiling(N, max_tile=128)

    xq_p = _pad_rows(xq, padded)
    xk_p = _pad_rows(xk_g, padded)
    xv_p = _pad_rows(xv_g, padded)
    pr_p = _pad_rows(p_rel, padded)

    row2 = pl.BlockSpec((tile, C), lambda i: (i, 0))
    row3 = pl.BlockSpec((tile, ns, C), lambda i: (i, 0, 0))
    row3p = pl.BlockSpec((tile, ns, 3), lambda i: (i, 0, 0))

    def full(shape):
        return pl.BlockSpec(shape, lambda i: (0,) * len(shape))

    weights = (
        P["p1_w"], P["p1_b"].reshape(1, 3),
        P["pln_s"].reshape(1, 3), P["pln_t"].reshape(1, 3),
        P["p2_w"], P["p2_b"].reshape(1, C),
        P["wln1_s"].reshape(1, C), P["wln1_t"].reshape(1, C),
        P["w1_w"], P["w1_b"].reshape(1, Cs),
        P["wln2_s"].reshape(1, Cs), P["wln2_t"].reshape(1, Cs),
        P["w2_w"], P["w2_b"].reshape(1, Cs),
        P["bn2_s"].reshape(1, C), P["bn2_t"].reshape(1, C),
    )
    weight_specs = [full(w.shape) for w in weights]

    flops = int(padded * ns * (2 * 3 * 3 + 2 * 3 * C + 2 * C * Cs
                               + 2 * Cs * Cs + 12 * C))
    bytes_accessed = int(4 * (2 * padded * C + 2 * padded * ns * C
                              + padded * ns * 3))
    cost = pl.CostEstimate(flops=flops,
                           transcendentals=int(padded * ns * Cs),
                           bytes_accessed=bytes_accessed)

    kern = functools.partial(_pt_attn_kernel, share_planes=share_planes)
    out = pl.pallas_call(
        kern,
        out_shape=jax.ShapeDtypeStruct((padded, C), jnp.float32),
        grid=(padded // tile,),
        in_specs=[row2, row3, row3, row3p] + weight_specs,
        out_specs=row2,
        compiler_params=pltpu.CompilerParams(
            dimension_semantics=("parallel",)),
        cost_estimate=cost,
    )(xq_p, xk_p, xv_p, pr_p, *weights)
    return out if padded == N else out[:N]


# ---------------------------------------------------------------------------
# Glue (plain JAX): knn, gathers, parameter setup
# ---------------------------------------------------------------------------
def knn_idx(p, nsample):
    # TODO(synk): O(N^2) distance matrix + top_k in XLA; block it (or write a
    # running-top-k Pallas kernel) for realistic point counts.
    d2 = jnp.sum((p[:, None, :] - p[None, :, :]) ** 2, axis=-1)
    _, idx = jax.lax.top_k(-d2, nsample)      # includes self, ascending distance
    return idx


def _fold_bn(gamma, beta, mean, var):
    scale = gamma / jnp.sqrt(var + EPS)
    shift = beta - mean * scale
    return scale, shift


def _rand_bn(key, c):
    k1, k2, k3, k4 = jax.random.split(key, 4)
    gamma = 1.0 + 0.1 * jax.random.normal(k1, (c,), jnp.float32)
    beta = 0.1 * jax.random.normal(k2, (c,), jnp.float32)
    mean = 0.1 * jax.random.normal(k3, (c,), jnp.float32)
    var = 1.0 + 0.5 * jnp.abs(jax.random.normal(k4, (c,), jnp.float32))
    return _fold_bn(gamma, beta, mean, var)


def _rand_linear(key, cin, cout, bias=True):
    k1, k2 = jax.random.split(key)
    w = jax.random.normal(k1, (cin, cout), jnp.float32) / jnp.sqrt(float(cin))
    b = (0.1 * jax.random.normal(k2, (cout,), jnp.float32)) if bias else None
    return w, b


def init_params(key, in_planes, planes, share_planes, num_observers):
    out_gibli = planes + sum(num_observers)
    cs = planes // share_planes
    ks = jax.random.split(key, 16)
    P = {}
    # TODO(synk): GIBLiLayer source not provided in the reference; stand-in is a
    # deterministic Linear(in_planes -> planes + sum(num_observers)).
    P["gib_w"], P["gib_b"] = _rand_linear(ks[0], in_planes, out_gibli)
    P["proj_w"], _ = _rand_linear(ks[1], out_gibli, planes, bias=False)
    P["bn1_s"], P["bn1_t"] = _rand_bn(ks[2], planes)
    # PointTransformerLayer
    P["q_w"], P["q_b"] = _rand_linear(ks[3], planes, planes)
    P["k_w"], P["k_b"] = _rand_linear(ks[4], planes, planes)
    P["v_w"], P["v_b"] = _rand_linear(ks[5], planes, planes)
    P["p1_w"], P["p1_b"] = _rand_linear(ks[6], 3, 3)
    P["pln_s"], P["pln_t"] = _rand_bn(ks[7], 3)
    P["p2_w"], P["p2_b"] = _rand_linear(ks[8], 3, planes)
    P["wln1_s"], P["wln1_t"] = _rand_bn(ks[9], planes)
    P["w1_w"], P["w1_b"] = _rand_linear(ks[10], planes, cs)
    P["wln2_s"], P["wln2_t"] = _rand_bn(ks[11], cs)
    P["w2_w"], P["w2_b"] = _rand_linear(ks[12], cs, cs)
    P["bn2_s"], P["bn2_t"] = _rand_bn(ks[13], planes)
    P["l3_w"], _ = _rand_linear(ks[14], planes, planes, bias=False)
    P["bn3_s"], P["bn3_t"] = _rand_bn(ks[15], planes)
    return P


def gibli_bottleneck_forward(p, x, o, params, *, share_planes=8, nsample=16):
    identity = x
    C = params["proj_w"].shape[1]

    # (1) GIBLi stand-in Linear + gibli_proj + bn1 + ReLU folded into ONE matmul.
    #     Only valid because the GIBLi stand-in is a pure Linear; a nonlinear
    #     GIBLiLayer must not be folded this way.
    w_gib = (params["gib_w"] @ params["proj_w"]) * params["bn1_s"][None, :]
    b_gib = (params["gib_b"] @ params["proj_w"]) * params["bn1_s"] + params["bn1_t"]
    x1 = fused_linear(x, w_gib, b_gib, relu=True)

    # (2) Fused q/k/v projection: one (C, 3C) matmul, lane-dense 96-wide output.
    w_qkv = jnp.concatenate([params["q_w"], params["k_w"], params["v_w"]], axis=1)
    b_qkv = jnp.concatenate([params["q_b"], params["k_b"], params["v_b"]], axis=0)
    qkv = fused_linear(x1, w_qkv, b_qkv, relu=False)
    xq, xk, xv = qkv[:, :C], qkv[:, C:2 * C], qkv[:, 2 * C:]

    # knn + neighbor grouping (plain JAX/XLA); idx includes the point itself.
    # TODO(synk): for large N, gather xk/xv in-kernel via scalar-prefetched idx
    # + manual DMA instead of materializing (N, ns, C) gathers in HBM.
    idx = knn_idx(p, nsample)                       # (N, ns)
    p_rel = p[idx] - p[:, None, :]                  # with_xyz relative coords
    xk_g = xk[idx]                                  # (N, ns, C)
    xv_g = xv[idx]                                  # (N, ns, C)

    # (3) Attention core + linear_p MLP + bn2 + ReLU, one kernel.
    x2 = pt_attention(xq, xk_g, xv_g, p_rel, params, share_planes)

    # (4) linear3 with bn3 folded + residual add + ReLU, one kernel epilogue.
    w_l3 = params["l3_w"] * params["bn3_s"][None, :]
    x3 = fused_linear(x2, w_l3, params["bn3_t"], residual=identity, relu=True)
    return [p, x3, o]


if __name__ == "__main__":
    N = 64
    in_planes = planes = 32
    share_planes = 8
    nsample = 16
    num_observers = [8, 8]

    key = jax.random.PRNGKey(0)
    kp, kx, kparams = jax.random.split(key, 3)
    p = jax.random.uniform(kp, (N, 3), jnp.float32)
    x = jax.random.normal(kx, (N, in_planes), jnp.float32)
    o = jnp.array([N], jnp.int32)

    params = init_params(kparams, in_planes, planes, share_planes, num_observers)

    p_out, x_out, o_out = gibli_bottleneck_forward(
        p, x, o, params, share_planes=share_planes, nsample=nsample
    )
    jax.block_until_ready(x_out)
    assert x_out.shape == (N, planes) and x_out.dtype == jnp.float32
    assert bool(jnp.all(jnp.isfinite(x_out)))
    print("KERNEL_OK")
</pallas_src>

<mosaic_0001>
module attributes {stable_mosaic.version = 11 : i64} {
  func.func @_linear_kernel(%arg0: i32, %arg1: memref<32x32xf32, #tpu.memory_space<vmem>>, %arg2: memref<32x32xf32, #tpu.memory_space<vmem>>, %arg3: memref<1x32xf32, #tpu.memory_space<vmem>>, %arg4: memref<32x32xf32, #tpu.memory_space<vmem>>) attributes {dimension_semantics = [#tpu.dimension_semantics<parallel>], iteration_bounds = array<i64: 2>, scalar_prefetch = 0 : i64, scratch_operands = 0 : i64, tpu.core_type = #tpu.core_type<tc>, window_params = [{transform_indices = @transform_0, window_bounds = array<i64: 32, 32>}, {pipeline_mode = #tpu.pipeline_mode<synchronous>, transform_indices = @transform_1, window_bounds = array<i64: 32, 32>}, {pipeline_mode = #tpu.pipeline_mode<synchronous>, transform_indices = @transform_2, window_bounds = array<i64: 1, 32>}, {transform_indices = @transform_3, window_bounds = array<i64: 32, 32>}]} {
    %c0 = arith.constant 0 : index
    %c0_0 = arith.constant 0 : index
    %0 = vector.load %arg1[%c0, %c0_0] : memref<32x32xf32, #tpu.memory_space<vmem>>, vector<32x32xf32>
    %c0_1 = arith.constant 0 : index
    %c0_2 = arith.constant 0 : index
    %1 = vector.load %arg2[%c0_1, %c0_2] : memref<32x32xf32, #tpu.memory_space<vmem>>, vector<32x32xf32>
    %cst = arith.constant dense<0.000000e+00> : vector<32x32xf32>
    %2 = tpu.matmul %0, %1, %cst {dimension_numbers = #tpu.dot_dimension_numbers<[1], [0], [0], [1], [0, 0, 1, 1], [], []>} : vector<32x32xf32>, vector<32x32xf32>, vector<32x32xf32> -> vector<32x32xf32>
    %c0_3 = arith.constant 0 : index
    %c0_4 = arith.constant 0 : index
    %3 = vector.load %arg3[%c0_3, %c0_4] : memref<1x32xf32, #tpu.memory_space<vmem>>, vector<1x32xf32>
    %4 = vector.broadcast %3 : vector<1x32xf32> to vector<32x32xf32>
    %5 = arith.addf %2, %4 : vector<32x32xf32>
    %cst_5 = arith.constant 0.000000e+00 : f32
    %6 = vector.broadcast %cst_5 : f32 to vector<32x32xf32>
    %7 = arith.maximumf %5, %6 : vector<32x32xf32>
    %c0_6 = arith.constant 0 : index
    %c0_7 = arith.constant 0 : index
    %8 = vector.load %arg4[%c0_6, %c0_7] : memref<32x32xf32, #tpu.memory_space<vmem>>, vector<32x32xf32>
    tpu.vector_store %arg4[%c0_6, %c0_7], %7 {strides = array<i32>} : memref<32x32xf32, #tpu.memory_space<vmem>>, vector<32x32xf32>,
    return
  }
  func.func @transform_0(%arg0: i32) -> (i32, i32) {
    %c0_i32 = arith.constant 0 : i32
    %c0_i32_0 = arith.constant 0 : i32
    return %arg0, %c0_i32 : i32, i32
  }
  func.func @transform_1(%arg0: i32) -> (i32, i32) {
    %c0_i32 = arith.constant 0 : i32
    %c0_i32_0 = arith.constant 0 : i32
    %c0_i32_1 = arith.constant 0 : i32
    return %c0_i32, %c0_i32_0 : i32, i32
  }
  func.func @transform_2(%arg0: i32) -> (i32, i32) {
    %c0_i32 = arith.constant 0 : i32
    %c0_i32_0 = arith.constant 0 : i32
    %c0_i32_1 = arith.constant 0 : i32
    return %c0_i32, %c0_i32_0 : i32, i32
  }
  func.func @transform_3(%arg0: i32) -> (i32, i32) {
    %c0_i32 = arith.constant 0 : i32
    %c0_i32_0 = arith.constant 0 : i32
    return %arg0, %c0_i32 : i32, i32
  }
}

</mosaic_0001>

<llo_original>
// kernel: tpu_custom_call.1
$region0: #{tpu_custom_call.1}
  #allocation0 [shape = 'u32[]', space=smem, size = 0x4, offset = 0x4, fixed_abs, tag = 'smem constant byte address 0x4 - core index']
  #allocation1 [shape = 'u32[144,128]{1,0:T(1,128)}', space=vmem, size = 0x12000, scoped, tag = 'internal scratch']
  %s0 = inlined_call_operand.vmem [shape: f32[64,32], index: 0, kind: input, shape index: {}]
  %s1 = inlined_call_operand.vmem [shape: f32[32,32], index: 1, kind: input, shape index: {}]
  %s2 = inlined_call_operand.vmem [shape: f32[1,32], index: 2, kind: input, shape index: {}]
  %s3 = inlined_call_operand.vmem [shape: f32[64,32], index: 3, kind: output, shape index: {}]
  %s4 = sld [smem:[#allocation0]]
  $region45: #{tpu_custom_call.1} parent=0
    _
  %s6 = ssub.s32 1, %s4
  %s7 = scalar_select 0, %s6, %s4
  loop: start=0, step=1, limit=4
  $region2: #{tpu_custom_call.1} parent=0 // loop_pre_header
    _
  $region3: #{tpu_custom_call.1} parent=0 // loop_header
    %s9 = sphi 0, %s13
    %p10 = scmp.ge.s32.totalorder %s9, 4
    %s19 = sphi 0, %s21
    %s22 = sphi 0, %s19
    %s23 = sphi 0, %s22
    %s39 = sphi 0, %s23
    %s43 = sphi 0, %s43
    %s45 = sphi 0, %s43
    %s46 = sphi 0, %s45
    %s60 = sphi 0, %s46
    %s64 = sphi 0, %s64
    %s66 = sphi 0, %s64
    %s67 = sphi 0, %s66
    %s81 = sphi 0, %s67
    %s87 = sphi 0, %s89
    %s90 = sphi 0, %s87
    %s91 = sphi 0, %s90
    %s107 = sphi 0, %s91
  $region4: #{tpu_custom_call.1} parent=0 // loop_header_branch
    %12 = sbr.rel (%p10) target = $region8
  $region5: #{tpu_custom_call.1} parent=0 // loop_body
    %s14 = ssub.s32 %s9, 1
    %s15 = ssub.s32 %s9, 2
    %s16 = sadd.s32 %s9, 1
    %s17 = ssub.s32 %s9, %s16
    %p18 = scmp.eq.s32.totalorder %s17, 0
    %s20 = sadd.s32 %s19, 1
    %s21 = scalar_select %p18, %s19, %s20
    %p24 = pneg %p18
    %p25 = scmp.eq.s32.totalorder %s9, 1
    %p26 = por %p24, %p25
    %p27 = scmp.ne.s32.totalorder %s19, %s22
    %p28 = scmp.eq.s32.totalorder %s9, 0
    %p29 = por %p27, %p28
    %p30 = scmp.ne.s32.totalorder %s19, %s22
    %p31 = scmp.eq.s32.totalorder %s14, 1
    %p32 = por %p30, %p31
    %p33 = scmp.ne.s32.totalorder %s22, %s23
    %p34 = scmp.eq.s32.totalorder %s14, 0
    %p35 = por %p33, %p34
    %p36 = scmp.ne.s32.totalorder %s22, %s23
    %p37 = scmp.eq.s32.totalorder %s15, 1
    %p38 = por %p36, %p37
    %p40 = scmp.ne.s32.totalorder %s23, %s39
    %p41 = scmp.eq.s32.totalorder %s15, 0
    %p42 = por %p40, %p41
    %s44 = sadd.s32 %s43, 1
    %p47 = scmp.eq.s32.totalorder %s9, 1
    %p48 = scmp.ne.s32.totalorder %s43, %s45
    %p49 = scmp.eq.s32.totalorder %s9, 0
    %p50 = por %p48, %p49
    %p51 = scmp.ne.s32.totalorder %s43, %s45
    %p52 = scmp.eq.s32.totalorder %s14, 1
    %p53 = por %p51, %p52
    %p54 = scmp.ne.s32.totalorder %s45, %s46
    %p55 = scmp.eq.s32.totalorder %s14, 0
    %p56 = por %p54, %p55
    %p57 = scmp.ne.s32.totalorder %s45, %s46
    %p58 = scmp.eq.s32.totalorder %s15, 1
    %p59 = por %p57, %p58
    %p61 = scmp.ne.s32.totalorder %s46, %s60
    %p62 = scmp.eq.s32.totalorder %s15, 0
    %p63 = por %p61, %p62
    %s65 = sadd.s32 %s64, 1
    %p68 = scmp.eq.s32.totalorder %s9, 1
    %p69 = scmp.ne.s32.totalorder %s64, %s66
    %p70 = scmp.eq.s32.totalorder %s9, 0
    %p71 = por %p69, %p70
    %p72 = scmp.ne.s32.totalorder %s64, %s66
    %p73 = scmp.eq.s32.totalorder %s14, 1
    %p74 = por %p72, %p73
    %p75 = scmp.ne.s32.totalorder %s66, %s67
    %p76 = scmp.eq.s32.totalorder %s14, 0
    %p77 = por %p75, %p76
    %p78 = scmp.ne.s32.totalorder %s66, %s67
    %p79 = scmp.eq.s32.totalorder %s15, 1
    %p80 = por %p78, %p79
    %p82 = scmp.ne.s32.totalorder %s67, %s81
    %p83 = scmp.eq.s32.totalorder %s15, 0
    %p84 = por %p82, %p83
    %s85 = ssub.s32 %s9, %s16
    %p86 = scmp.eq.s32.totalorder %s85, 0
    %s88 = sadd.s32 %s87, 1
    %s89 = scalar_select %p86, %s87, %s88
    %p92 = pneg %p86
    %p93 = scmp.eq.s32.totalorder %s9, 1
    %p94 = por %p92, %p93
    %p95 = scmp.ne.s32.totalorder %s87, %s90
    %p96 = scmp.eq.s32.totalorder %s9, 0
    %p97 = por %p95, %p96
    %p98 = scmp.ne.s32.totalorder %s87, %s90
    %p99 = scmp.eq.s32.totalorder %s14, 1
    %p100 = por %p98, %p99
    %p101 = scmp.ne.s32.totalorder %s90, %s91
    %p102 = scmp.eq.s32.totalorder %s14, 0
    %p103 = por %p101, %p102
    %p104 = scmp.ne.s32.totalorder %s90, %s91
    %p105 = scmp.eq.s32.totalorder %s15, 1
    %p106 = por %p104, %p105
    %p108 = scmp.ne.s32.totalorder %s91, %s107
    %p109 = scmp.eq.s32.totalorder %s15, 0
    %p110 = por %p108, %p109
    %p111 = scmp.le.s32.totalorder 1, %s9
    %p112 = scmp.lt.s32.totalorder %s9, 3
    %p113 = pnand %p111, %p112
    %p114 = pneg %p113
    // Predicated region
    $region9: #{tpu_custom_call.1} parent=5 // pred_check
      _
    $region10: #{tpu_custom_call.1} parent=5 // pred_check_branch
      %116 = sbr.rel (%p113) target = $region12
    $region11: #{tpu_custom_call.1} parent=5 // pred_region
      %s117 = ssub.s32 %s9, 1
      // Predicated region
      $region13: #{tpu_custom_call.1} parent=11 // pred_check
        %p118 = pneg %p56
      $region14: #{tpu_custom_call.1} parent=11 // pred_check_branch
        %120 = sbr.rel (%p118) target = $region16
      $region15: #{tpu_custom_call.1} parent=11 // pred_region
        _
      $region16: #{tpu_custom_call.1} parent=11 // pred_fallthru
        _
      // Predicated region
      $region17: #{tpu_custom_call.1} parent=11 // pred_check
        %p121 = pneg %p77
      $region18: #{tpu_custom_call.1} parent=11 // pred_check_branch
        %123 = sbr.rel (%p121) target = $region20
      $region19: #{tpu_custom_call.1} parent=11 // pred_region
        _
      $region20: #{tpu_custom_call.1} parent=11 // pred_fallthru
        _
    $region12: #{tpu_custom_call.1} parent=5 // pred_fallthru
      _
    %p124 = scmp.lt.s32.totalorder %s9, 2
    // Predicated region
    $region21: #{tpu_custom_call.1} parent=5 // pred_check
      %p125 = pneg %p124
    $region22: #{tpu_custom_call.1} parent=5 // pred_check_branch
      %127 = sbr.rel (%p125) target = $region24
    $region23: #{tpu_custom_call.1} parent=5 // pred_region
      // Predicated region
      $region25: #{tpu_custom_call.1} parent=23 // pred_check
        %p128 = pneg %p29
      $region26: #{tpu_custom_call.1} parent=23 // pred_check_branch
        %130 = sbr.rel (%p128) target = $region28
      $region27: #{tpu_custom_call.1} parent=23 // pred_region
        %s131 = smul.u32 4, %s9
        %p132 = scmp.lt.s32.totalorder %s131, 7
        %s133 = scalar_select %p132, %s131, 7
        %s134 = smul.addr %s133, 8
        %s135 = scalar_lea.vmem %s0, %s134
        %s136 = smul.u32 4, %s9
      $region28: #{tpu_custom_call.1} parent=23 // pred_fallthru
        _
    $region24: #{tpu_custom_call.1} parent=5 // pred_fallthru
      _
    %p137 = scmp.le.s32.totalorder 1, %s9
    %p138 = scmp.lt.s32.totalorder %s9, 3
    %p139 = pnand %p137, %p138
    %p140 = pneg %p139
    // Predicated region
    $region29: #{tpu_custom_call.1} parent=5 // pred_check
      _
    $region30: #{tpu_custom_call.1} parent=5 // pred_check_branch
      %142 = sbr.rel (%p139) target = $region32
    $region31: #{tpu_custom_call.1} parent=5 // pred_region
      %s143 = ssub.s32 %s9, 1
      %s144 = smul.u32 4, %s14
      %p145 = scmp.lt.s32.totalorder %s144, 7
      %s146 = scalar_select %p145, %s144, 7
      %s147 = smul.addr %s146, 8
      %s148 = scalar_lea.vmem %s0, %s147
      %p149 = pneg %p35
      %p150 = pneg %p32
      %p151 = pneg %p56
      %p152 = pneg %p53
      %p153 = pneg %p77
      %p154 = pneg %p74
      %p155 = pneg %p103
      %p156 = pneg %p100
      %s157 = smul.u32 4, %s14
      %p158 = scmp.lt.s32.totalorder %s157, 7
      %s159 = scalar_select %p158, %s157, 7
      %s160 = smul.addr %s159, 8
      %s161 = scalar_lea.vmem %s3, %s160
      %s162 = smul.u32 4, %s14
      %p163 = scmp.lt.s32.totalorder %s162, 7
      %s164 = scalar_select %p163, %s162, 7
      %s165 = smul.addr %s164, 8
      %s166 = scalar_lea.vmem %s0, %s165
      %s167 = smul.u32 4, %s14
      %s168 = smul.u32 4, %s14
      %p169 = scmp.lt.s32.totalorder %s168, 7
      %s170 = scalar_select %p169, %s168, 7
      %s171 = smul.addr %s170, 8
      %s172 = scalar_lea.vmem %s3, %s171
      %s173 = smul.u32 4, %s14
      %v174 = vld [vmem:[%s166] sm:$0xff]
      %v175 = vld [vmem:[%s166 + $0x8] sm:$0xff]
      %v176 = vld [vmem:[%s166 + $0x10] sm:$0xff]
      %v177 = vld [vmem:[%s166 + $0x18] sm:$0xff]
      %v178 = vld [vmem:[%s1] sm:$0xff]
      %v179 = vld [vmem:[%s1 + $0x8] sm:$0xff]
      %v180 = vld [vmem:[%s1 + $0x10] sm:$0xff]
      %v181 = vld [vmem:[%s1 + $0x18] sm:$0xff]
      %v182 = vld [vmem:[%s2] sm:$0x1]
      %v184 = vlaneseq
      %v185 = vshrl.u32 %v184, 7
      %v186 = vsub.s32 0, %v185
      %v187 = vrot.slane %v182, %v186
      %vm189 = vcmask 261120
      %v191 = vsel %vm189, %v174, 0
      %v194 = vsel %vm189, %v175, 0
      %v197 = vsel %vm189, %v176, 0
      %v200 = vsel %vm189, %v177, 0
      %202 = vmatprep.subr.mxu0 0.0
      %203 = vmatpush1.msra.mxu0 %v178
      %204 = vmatprep.subr.mxu0 0.0
      %205 = vmatpush1.msra.mxu0 %v179
      %206 = vmatprep.subr.mxu0 0.0
      %207 = vmatpush1.msra.mxu0 %v180
      %208 = vmatprep.subr.mxu0 0.0
      %209 = vmatpush1.msra.mxu0 %v181
      %210 = vmatprep.subr.mxu0 0.0
      %211 = vmatpush1.msra.mxu0 0.0
      %212 = vmatprep.subr.mxu0 0.0
      %213 = vmatpush1.msra.mxu0 0.0
      %214 = vmatprep.subr.mxu0 0.0
      %215 = vmatpush1.msra.mxu0 0.0
      %216 = vmatprep.subr.mxu0 0.0
      %217 = vmatpush1.msra.mxu0 0.0
      %218 = vmatprep.subr.mxu0 0.0
      %219 = vmatpush1.msra.mxu0 0.0
      %220 = vmatprep.subr.mxu0 0.0
      %221 = vmatpush1.msra.mxu0 0.0
      %222 = vmatprep.subr.mxu0 0.0
      %223 = vmatpush1.msra.mxu0 0.0
      %224 = vmatprep.subr.mxu0 0.0
      %225 = vmatpush1.msra.mxu0 0.0
      %226 = vmatprep.subr.mxu0 0.0
      %227 = vmatpush1.msra.mxu0 0.0
      %228 = vmatprep.subr.mxu0 0.0
      %229 = vmatpush1.msra.mxu0 0.0
      %230 = vmatprep.subr.mxu0 0.0
      %231 = vmatpush1.msra.mxu0 0.0
      %232 = vmatprep.subr.mxu0 0.0
      %233 = vmatpush1.msra.mxu0 0.0
      %234 = vmatprep.subr.mxu0 0.0
      %235 = vmatpush1.msra.mxu0 0.0
      %236 = vmatprep.subr.mxu0 0.0
      %237 = vmatpush1.msra.mxu0 0.0
      %238 = vmatprep.subr.mxu0 0.0
      %239 = vmatpush1.msra.mxu0 0.0
      %240 = vmatprep.subr.mxu0 0.0
      %241 = vmatpush1.msra.mxu0 0.0
      %242 = vmatprep.subr.mxu0 0.0
      %243 = vmatpush1.msra.mxu0 0.0
      %244 = vmatprep.subr.mxu0 0.0
      %245 = vmatpush1.msra.mxu0 0.0
      %246 = vmatprep.subr.mxu0 0.0
      %247 = vmatpush1.msra.mxu0 0.0
      %248 = vmatprep.subr.mxu0 0.0
      %249 = vmatpush1.msra.mxu0 0.0
      %250 = vmatprep.subr.mxu0 0.0
      %251 = vmatpush1.msra.mxu0 0.0
      %252 = vmatprep.subr.mxu0 0.0
      %253 = vmatpush1.msra.mxu0 0.0
      %254 = vmatprep.subr.mxu0 0.0
      %255 = vmatpush1.msra.mxu0 0.0
      %256 = vmatprep.subr.mxu0 0.0
      %257 = vmatpush1.msra.mxu0 0.0
      %258 = vmatprep.subr.mxu0 0.0
      %259 = vmatpush1.msra.mxu0 0.0
      %260 = vmatprep.subr.mxu0 0.0
      %261 = vmatpush1.msra.mxu0 0.0
      %262 = vmatprep.subr.mxu0 0.0
      %263 = vmatpush1.msra.mxu0 0.0
      %264 = vmatprep.subr.mxu0 0.0
      %265 = vmatpush1.msra.mxu0 0.0
      %266 = vmatprep.mubr.f32.mxu0 0.0
      %267 = vmatmul.mubr.f32.gmra.mrb[0].mxu0 %v191
      %v268 = vpop.f32.mrb[0].mxu0
      %v269 = vadd.f32 %v187, %v268
      %v270 = vpop.f32.mrb[0].mxu0
      %271 = vmatprep.mubr.f32.mxu0 0.0
      %272 = vmatmul.mubr.f32.gmra.mrb[0].mxu0 %v194
      %v273 = vpop.f32.mrb[0].mxu0
      %v274 = vadd.f32 %v187, %v273
      %v275 = vpop.f32.mrb[0].mxu0
      %276 = vmatprep.mubr.f32.mxu0 0.0
      %277 = vmatmul.mubr.f32.gmra.mrb[0].mxu0 %v197
      %v278 = vpop.f32.mrb[0].mxu0
      %v279 = vadd.f32 %v187, %v278
      %v280 = vpop.f32.mrb[0].mxu0
      %281 = vmatprep.mubr.f32.mxu0 0.0
      %282 = vmatmul.mubr.f32.gmra.mrb[0].mxu0 %v200
      %v283 = vpop.f32.mrb[0].mxu0
      %v284 = vadd.f32 %v187, %v283
      %v285 = vpop.f32.mrb[0].mxu0
      %286 = vdwg.mxu0
      %v287 = vmax.f32 %v269, 0.0
      %v288 = vmax.f32 %v274, 0.0
      %v289 = vmax.f32 %v279, 0.0
      %v290 = vmax.f32 %v284, 0.0
      %291 = vst.msk [vmem:[%s172] sm:$0xff] %vm189, %v287
      %292 = vst.msk [vmem:[%s172 + $0x8] sm:$0xff] %vm189, %v288
      %293 = vst.msk [vmem:[%s172 + $0x10] sm:$0xff] %vm189, %v289
      %294 = vst.msk [vmem:[%s172 + $0x18] sm:$0xff] %vm189, %v290
      %s295 = smul.u32 4, %s14
      %p296 = scmp.lt.s32.totalorder %s295, 7
      %s297 = scalar_select %p296, %s295, 7
      %s298 = smul.addr %s297, 8
      %s299 = scalar_lea.vmem %s3, %s298
      // Predicated region
      $region33: #{tpu_custom_call.1} parent=31 // pred_check
        %p300 = pneg %p100
      $region34: #{tpu_custom_call.1} parent=31 // pred_check_branch
        %302 = sbr.rel (%p300) target = $region36
      $region35: #{tpu_custom_call.1} parent=31 // pred_region
        %s303 = smul.u32 4, %s14
      $region36: #{tpu_custom_call.1} parent=31 // pred_fallthru
        _
    $region32: #{tpu_custom_call.1} parent=5 // pred_fallthru
      _
    %p304 = scmp.le.s32.totalorder 2, %s9
    // Predicated region
    $region37: #{tpu_custom_call.1} parent=5 // pred_check
      %p305 = pneg %p304
    $region38: #{tpu_custom_call.1} parent=5 // pred_check_branch
      %307 = sbr.rel (%p305) target = $region40
    $region39: #{tpu_custom_call.1} parent=5 // pred_region
      %s308 = ssub.s32 %s9, 2
      // Predicated region
      $region41: #{tpu_custom_call.1} parent=39 // pred_check
        %p309 = pneg %p106
      $region42: #{tpu_custom_call.1} parent=39 // pred_check_branch
        %311 = sbr.rel (%p309) target = $region44
      $region43: #{tpu_custom_call.1} parent=39 // pred_region
        %s312 = smul.u32 4, %s15
        %p313 = scmp.lt.s32.totalorder %s312, 7
        %s314 = scalar_select %p313, %s312, 7
        %s315 = smul.addr %s314, 8
        %s316 = scalar_lea.vmem %s3, %s315
      $region44: #{tpu_custom_call.1} parent=39 // pred_fallthru
        _
    $region40: #{tpu_custom_call.1} parent=5 // pred_fallthru
      _
  $region6: #{tpu_custom_call.1} parent=0 // loop_footer
    %s13 = sadd.s32 1, %s9
  $region7: #{tpu_custom_call.1} parent=0 // loop_footer_branch
    %8 = sbr.rel target = $region3
  $region8: #{tpu_custom_call.1} parent=0 // loop_exit
    _

</llo_original>
